<compile_context>
chip_gen: v6e
topology: v6e:2x2x1
jax: 0.10.0
libtpu: 0.0.40
codegen_flags: <defaults>
</compile_context>

<pallas_src>
import functools

import jax
import jax.numpy as jnp
from jax import lax
from jax.experimental import pallas as pl
from jax.experimental.pallas import tpu as pltpu


def _ls_ce_block_kernel(x_ref, t_ref, out_ref, *, smoothing: float,
                        n_total: int, block_rows: int):
    """Partial label-smoothing CE sum for one (TN, C) block of rows.

    x_ref:   (TN, C) logits tile (any float dtype; upcast to f32 here)
    t_ref:   (TN, 1) int32 targets
    out_ref: (1, 1)  f32 SMEM partial sum for this block
    """
    i = pl.program_id(0)
    x = x_ref[...].astype(jnp.float32)                           # (TN, C)
    tn, c = x.shape

    # Per-row statistics only (keepdims -> stay (TN, 1), no rank-1 relayouts).
    m = jnp.max(x, axis=-1, keepdims=True)                       # (TN, 1)
    s = jnp.sum(jnp.exp(x - m), axis=-1, keepdims=True)          # (TN, 1)
    sum_x = jnp.sum(x, axis=-1, keepdims=True)                   # (TN, 1)

    # gather(x, target) per row via masked select + row-sum (no TPU gather).
    col = lax.broadcasted_iota(jnp.int32, (tn, c), 1)            # (TN, C)
    x_t = jnp.sum(jnp.where(col == t_ref[...], x, 0.0),
                  axis=-1, keepdims=True)                        # (TN, 1)

    lse = m + jnp.log(s)                                         # logsumexp
    nll_loss = lse - x_t                                         # -logprobs[t]
    smooth_loss = lse - sum_x * (1.0 / c)                        # -mean(logprobs)

    confidence = 1.0 - smoothing
    loss = confidence * nll_loss + smoothing * smooth_loss       # (TN, 1)

    # Mask padded rows of the (possibly ragged) last block.
    row = i * block_rows + lax.broadcasted_iota(jnp.int32, (tn, 1), 0)
    loss = jnp.where(row < n_total, loss, 0.0)

    out_ref[0, 0] = jnp.sum(loss)


def label_smoothing_cross_entropy(x: jax.Array, target: jax.Array,
                                  smoothing: float = 0.1,
                                  block_rows: int | None = None) -> jax.Array:
    """x: (N, C) float logits, target: (N,) integer class ids -> scalar f32."""
    n, c = x.shape
    t_col = target.astype(jnp.int32).reshape(n, 1)

    if block_rows is None:
        # Target ~2 MiB per logits block (double-buffered => ~4 MiB of VMEM),
        # rounded down to a multiple of 8 sublanes, capped at 512 rows.
        itemsize = jnp.dtype(x.dtype).itemsize
        rows = (2 * 1024 * 1024) // max(1, c * itemsize)
        block_rows = max(8, min(512, (rows // 8) * 8))
    if n <= block_rows:
        block_rows = n            # one full block (full-extent dims always legal)
    num_blocks = pl.cdiv(n, block_rows)

    kernel = functools.partial(
        _ls_ce_block_kernel,
        smoothing=float(smoothing),
        n_total=n,
        block_rows=block_rows,
    )

    partial_sums = pl.pallas_call(
        kernel,
        grid=(num_blocks,),
        in_specs=[
            pl.BlockSpec((block_rows, c), lambda i: (i, 0)),   # logits tile
            pl.BlockSpec((block_rows, 1), lambda i: (i, 0)),   # targets tile
        ],
        # Scalar partial sum per block lives in SMEM (no lane-sparse VMEM store).
        out_specs=pl.BlockSpec((1, 1), lambda i: (i, 0),
                               memory_space=pltpu.SMEM),
        out_shape=jax.ShapeDtypeStruct((num_blocks, 1), jnp.float32),
        compiler_params=pltpu.CompilerParams(
            dimension_semantics=("parallel",),      # megacore-shardable on v7x
            vmem_limit_bytes=32 * 1024 * 1024,
        ),
    )(x, t_col)

    # Tiny final reduction over per-block partial sums; divide by the true N.
    return jnp.sum(partial_sums) / n


def _reference(x, target, smoothing=0.1):
    confidence = 1.0 - smoothing
    logprobs = jax.nn.log_softmax(x.astype(jnp.float32), axis=-1)
    nll = -jnp.take_along_axis(
        logprobs, target[:, None].astype(jnp.int32), axis=-1)[:, 0]
    smooth = -jnp.mean(logprobs, axis=-1)
    return jnp.mean(confidence * nll + smoothing * smooth)


if __name__ == "__main__":
    key = jax.random.PRNGKey(0)

    # Case 1: small single-block problem (batch=8, 32 classes), f32 logits.
    k1, k2, k3, k4 = jax.random.split(key, 4)
    N1, C1 = 8, 32
    x1 = jax.random.normal(k1, (N1, C1), dtype=jnp.float32)
    t1 = jax.random.randint(k2, (N1,), 0, C1, dtype=jnp.int32)
    loss1 = jax.block_until_ready(label_smoothing_cross_entropy(x1, t1, 0.1))
    ref1 = _reference(x1, t1, 0.1)
    assert jnp.allclose(loss1, ref1, atol=1e-5, rtol=1e-5), (loss1, ref1)

    # Case 2: exercises the N-grid, ragged last block + masking (3 blocks of 8
    # rows covering 20 valid rows), bf16 logits streamed without wrapper upcast.
    N2, C2 = 20, 32
    x2 = jax.random.normal(k3, (N2, C2), dtype=jnp.float32).astype(jnp.bfloat16)
    t2 = jax.random.randint(k4, (N2,), 0, C2, dtype=jnp.int32)
    loss2 = jax.block_until_ready(
        label_smoothing_cross_entropy(x2, t2, 0.1, block_rows=8))
    ref2 = _reference(x2.astype(jnp.float32), t2, 0.1)
    assert jnp.allclose(loss2, ref2, atol=2e-2, rtol=2e-2), (loss2, ref2)

    print("KERNEL_OK")
</pallas_src>

<mosaic_0001>
module attributes {stable_mosaic.version = 11 : i64} {
  func.func @_ls_ce_block_kernel(%arg0: i32, %arg1: memref<8x32xf32, #tpu.memory_space<vmem>>, %arg2: memref<8x1xi32, #tpu.memory_space<vmem>>, %arg3: memref<1x1xf32, #tpu.memory_space<smem>>) attributes {dimension_semantics = [#tpu.dimension_semantics<parallel>], iteration_bounds = array<i64: 1>, scalar_prefetch = 0 : i64, scratch_operands = 0 : i64, tpu.core_type = #tpu.core_type<tc>, window_params = [{transform_indices = @transform_0, window_bounds = array<i64: 8, 32>}, {transform_indices = @transform_1, window_bounds = array<i64: 8, 1>}, {transform_indices = @transform_2, window_bounds = array<i64: 1, 1>}]} {
    %c0 = arith.constant 0 : index
    %c0_0 = arith.constant 0 : index
    %0 = vector.load %arg1[%c0, %c0_0] : memref<8x32xf32, #tpu.memory_space<vmem>>, vector<8x32xf32>
    %cst = arith.constant dense<0xFF800000> : vector<8xf32>
    %1 = vector.multi_reduction <maximumf>, %0, %cst [1] : vector<8x32xf32> to vector<8xf32>
    %2 = vector.shape_cast %1 : vector<8xf32> to vector<8x1xf32>
    %3 = vector.broadcast %2 : vector<8x1xf32> to vector<8x32xf32>
    %4 = arith.subf %0, %3 : vector<8x32xf32>
    %5 = math.exp %4 : vector<8x32xf32>
    %cst_1 = arith.constant dense<0.000000e+00> : vector<8xf32>
    %6 = vector.multi_reduction <add>, %5, %cst_1 [1] : vector<8x32xf32> to vector<8xf32>
    %7 = vector.shape_cast %6 : vector<8xf32> to vector<8x1xf32>
    %cst_2 = arith.constant dense<0.000000e+00> : vector<8xf32>
    %8 = vector.multi_reduction <add>, %0, %cst_2 [1] : vector<8x32xf32> to vector<8xf32>
    %9 = vector.shape_cast %8 : vector<8xf32> to vector<8x1xf32>
    %10 = tpu.iota {dimensions = array<i32: 1>} : vector<8x32xi32>
    %c0_3 = arith.constant 0 : index
    %c0_4 = arith.constant 0 : index
    %11 = vector.load %arg2[%c0_3, %c0_4] : memref<8x1xi32, #tpu.memory_space<vmem>>, vector<8x1xi32>
    %12 = vector.broadcast %11 : vector<8x1xi32> to vector<8x32xi32>
    %13 = arith.cmpi eq, %10, %12 : vector<8x32xi32>
    %cst_5 = arith.constant 0.000000e+00 : f32
    %14 = vector.broadcast %cst_5 : f32 to vector<8x32xf32>
    %15 = arith.select %13, %0, %14 : vector<8x32xi1>, vector<8x32xf32>
    %cst_6 = arith.constant dense<0.000000e+00> : vector<8xf32>
    %16 = vector.multi_reduction <add>, %15, %cst_6 [1] : vector<8x32xf32> to vector<8xf32>
    %17 = vector.shape_cast %16 : vector<8xf32> to vector<8x1xf32>
    %18 = math.log %7 : vector<8x1xf32>
    %19 = arith.addf %2, %18 : vector<8x1xf32>
    %20 = arith.subf %19, %17 : vector<8x1xf32>
    %cst_7 = arith.constant 3.125000e-02 : f32
    %21 = vector.broadcast %cst_7 : f32 to vector<8x1xf32>
    %22 = arith.mulf %9, %21 : vector<8x1xf32>
    %23 = arith.subf %19, %22 : vector<8x1xf32>
    %cst_8 = arith.constant 0.899999976 : f32
    %24 = vector.broadcast %cst_8 : f32 to vector<8x1xf32>
    %25 = arith.mulf %24, %20 : vector<8x1xf32>
    %cst_9 = arith.constant 1.000000e-01 : f32
    %26 = vector.broadcast %cst_9 : f32 to vector<8x1xf32>
    %27 = arith.mulf %26, %23 : vector<8x1xf32>
    %28 = arith.addf %25, %27 : vector<8x1xf32>
    %c8_i32 = arith.constant 8 : i32
    %29 = arith.muli %arg0, %c8_i32 : i32
    %30 = tpu.iota {dimensions = array<i32: 0>} : vector<8x1xi32>
    %31 = vector.broadcast %29 : i32 to vector<8x1xi32>
    %32 = arith.addi %31, %30 : vector<8x1xi32>
    %c8_i32_10 = arith.constant 8 : i32
    %33 = vector.broadcast %c8_i32_10 : i32 to vector<8x1xi32>
    %34 = arith.cmpi slt, %32, %33 : vector<8x1xi32>
    %cst_11 = arith.constant 0.000000e+00 : f32
    %35 = vector.broadcast %cst_11 : f32 to vector<8x1xf32>
    %36 = arith.select %34, %28, %35 : vector<8x1xi1>, vector<8x1xf32>
    %37 = vector.shape_cast %36 : vector<8x1xf32> to vector<1x8x1xf32>
    %cst_12 = arith.constant dense<0.000000e+00> : vector<1xf32>
    %38 = vector.multi_reduction <add>, %37, %cst_12 [1, 2] : vector<1x8x1xf32> to vector<1xf32>
    %39 = vector.shape_cast %38 : vector<1xf32> to vector<1x1x1xf32>
    %40 = vector.extract %39[0, 0, 0] : f32 from vector<1x1x1xf32>
    %c0_13 = arith.constant 0 : index
    %c0_14 = arith.constant 0 : index
    %41 = memref.load %arg3[%c0_13, %c0_14] : memref<1x1xf32, #tpu.memory_space<smem>>
    memref.store %40, %arg3[%c0_13, %c0_14] : memref<1x1xf32, #tpu.memory_space<smem>>
    return
  }
  func.func @transform_0(%arg0: i32) -> (i32, i32) {
    %c0_i32 = arith.constant 0 : i32
    %c0_i32_0 = arith.constant 0 : i32
    return %arg0, %c0_i32 : i32, i32
  }
  func.func @transform_1(%arg0: i32) -> (i32, i32) {
    %c0_i32 = arith.constant 0 : i32
    %c0_i32_0 = arith.constant 0 : i32
    return %arg0, %c0_i32 : i32, i32
  }
  func.func @transform_2(%arg0: i32) -> (i32, i32) {
    %c0_i32 = arith.constant 0 : i32
    %c0_i32_0 = arith.constant 0 : i32
    return %arg0, %c0_i32 : i32, i32
  }
}

</mosaic_0001>

<llo_original>
// kernel: tpu_custom_call.1
$region0: #{tpu_custom_call.1}
  #allocation0 [shape = 'u32[]', space=smem, size = 0x4, offset = 0x4, fixed_abs, tag = 'smem constant byte address 0x4 - core index']
  #allocation1 [shape = 'u32[144,128]{1,0:T(1,128)}', space=vmem, size = 0x12000, scoped, tag = 'internal scratch']
  %s0 = inlined_call_operand.vmem [shape: f32[8,32], index: 0, kind: input, shape index: {}]
  %s1 = inlined_call_operand.vmem [shape: s32[8,1], index: 1, kind: input, shape index: {}]
  %s2 = inlined_call_operand.hbm [shape: f32[1,1], index: 2, kind: output, shape index: {}]
  %s3 = sld [smem:[#allocation0]]
  $region18: #{tpu_custom_call.1} parent=0
    _
  %s5 = ssub.s32 1, %s3
  %s6 = scalar_select 0, %s5, %s3
  $region1: #{tpu_custom_call.1} parent=0
    #allocation2 [shape = 'u8[512]{0}', space=smem, size = 0x200, scoped, tag = 'output window, operand 0, single buffered']
    #allocation3 [shape = 's32[1]{0}', space=sflag, size = 0x4, scoped, tag = 'scoped memory for tpu_custom_call.1']
    %7 = vsyncpa [#allocation3], 0
    // Predicated region
    $region2: #{tpu_custom_call.1} parent=1 // pred_check
      _
    $region3: #{tpu_custom_call.1} parent=1 // pred_check_branch
      %9 = sbr.rel (0) target = $region5
    $region4: #{tpu_custom_call.1} parent=1 // pred_region
      _
    $region5: #{tpu_custom_call.1} parent=1 // pred_fallthru
      _
    // Predicated region
    $region6: #{tpu_custom_call.1} parent=1 // pred_check
      _
    $region7: #{tpu_custom_call.1} parent=1 // pred_check_branch
      %11 = sbr.rel (0) target = $region9
    $region8: #{tpu_custom_call.1} parent=1 // pred_region
      _
    $region9: #{tpu_custom_call.1} parent=1 // pred_fallthru
      _
    %v12 = vld [vmem:[%s0] sm:$0xff]
    %vm13 = vcmask 261120
    %v14 = vsel %vm13, %v12, -inf
    %15 = vmax.xlane.f32.xlu0 %v14
    %v16 = vpop.xlane.xlu0 %15
    %v17 = vsub.f32 %v12, %v16
    %v18 = vmul.f32 %v17, 1.442695
    %v19 = vpow.pop %v18
    %v20 = vsel %vm13, %v19, 0.0
    %21 = vadd.xlane.f32.xlu0 %v20
    %v22 = vpop.xlane.xlu0 %21
    %v23 = vsel %vm13, %v12, 0.0
    %24 = vadd.xlane.f32.xlu0 %v23
    %v25 = vpop.xlane.xlu0 %24
    %v26 = vlaneseq
    %v27 = vand.u32 %v26, 127
    %v28 = vld [vmem:[%s1] sm:$0xff]
    %29 = vset.pattern.permute.xlu0 0
    %30 = vperm.xlu0 %29, %v28
    %v31 = vpop.permute.xlu0 %30
    %vm32 = vcmp.eq.s32.totalorder %v27, %v31
    %v33 = vsel %vm32, %v12, 0.0
    %v34 = vsel %vm13, %v33, 0.0
    %35 = vadd.xlane.f32.xlu0 %v34
    %v36 = vpop.xlane.xlu0 %35
    %v37 = vlog2.pop %v22
    %v38 = vmul.f32 %v37, 0.6931472
    %v39 = vadd.f32 %v16, %v38
    %v40 = vsub.f32 %v39, %v36
    %v41 = vmul.f32 %v25, 0.03125
    %v42 = vsub.f32 %v39, %v41
    %v43 = vmul.f32 %v40, 0.9
    %v44 = vmul.f32 %v42, 0.1
    %v45 = vadd.f32 %v43, %v44
    %s46 = smul.u32 0, 8
    %v47 = vlaneseq
    %v48 = vshrl.u32 %v47, 7
    %v49 = vstv %s46
    %v50 = vadd.s32 %v49, %v48
    %vm51 = vcmp.lt.s32.totalorder %v50, 8
    %v52 = vsel %vm51, %v45, 0.0
    %vm53 = vcmask 7168
    %v54 = vsel %vm53, %v52, 0.0
    %55 = vadd.xlane.f32.xlu0 %v54
    %v56 = vpop.xlane.xlu0 %55
    %v57 = vrot.slane %v56, 4
    %v58 = vadd.f32 %v56, %v57
    %v59 = vrot.slane %v58, 2
    %v60 = vadd.f32 %v58, %v59
    %v61 = vrot.slane %v60, 1
    %v62 = vadd.f32 %v60, %v61
    %s63 = vtos %v62
    %s64 = scalar_lea.smem [#allocation2], 0
    %65 = sst [smem:[%s64]] %s63
    // Predicated region
    $region10: #{tpu_custom_call.1} parent=1 // pred_check
      _
    $region11: #{tpu_custom_call.1} parent=1 // pred_check_branch
      %67 = sbr.rel (0) target = $region13
    $region12: #{tpu_custom_call.1} parent=1 // pred_region
      %s69 = ssub.s32 16, 16
      %70 = vsyncadd [#allocation3], %s69
      %73 = dma.smem_to_hbm [#allocation2], 16, %s2, [#allocation3]
    $region13: #{tpu_custom_call.1} parent=1 // pred_fallthru
      _
    // Predicated region
    $region14: #{tpu_custom_call.1} parent=1 // pred_check
      _
    $region15: #{tpu_custom_call.1} parent=1 // pred_check_branch
      %75 = sbr.rel (0) target = $region17
    $region16: #{tpu_custom_call.1} parent=1 // pred_region
      %76 = dma.done [#allocation3], 16
    $region17: #{tpu_custom_call.1} parent=1 // pred_fallthru
      _
    %77 = sfence
    %78 = vsyncpa [#allocation3], 1

</llo_original>
